<compile_context>
chip_gen: v6e
topology: v6e:2x2x1
jax: 0.10.0
libtpu: 0.0.40
codegen_flags: <defaults>
</compile_context>

<pallas_src>
import functools
import math

import jax
import jax.numpy as jnp
from jax.experimental import pallas as pl
from jax.experimental.pallas import tpu as pltpu


def _round_up(x, m):
    return (x + m - 1) // m * m


def _quantize_codes(v, bits, inv_step):
    """clamp(round(v / step), qmin, qmax) -- returns *codes* (de-scale is folded out)."""
    qmin = -(2.0 ** (bits - 1))
    qmax = 2.0 ** (bits - 1) - 1.0
    q = jnp.clip(jnp.round(v * inv_step), qmin, qmax)
    if bits <= 8:
        # |code| <= 128 -> exactly representable in bf16: bf16 MXU rate, no error.
        q = q.astype(jnp.bfloat16)
    return q


def linear_q_kernel(x_ref, w_ref, b_ref, o_ref, acc_ref, *, bits, step, single_k):
    """One (i, j, k) grid step of out = quant(X) @ quant(W).T + quant(b)."""
    x = x_ref[...].astype(jnp.float32)
    w = w_ref[...].astype(jnp.float32)

    if bits == 32:
        xq, wq = x, w
        out_scale = 1.0
    else:
        inv_step = 1.0 / step
        xq = _quantize_codes(x, bits, inv_step)
        wq = _quantize_codes(w, bits, inv_step)
        out_scale = step * step   # folded de-scale for both operands

    partial = jax.lax.dot_general(
        xq, wq,
        dimension_numbers=(((1,), (1,)), ((), ())),   # X @ W.T (weight kept (N, K))
        preferred_element_type=jnp.float32,
    )

    def epilogue(acc):
        b = b_ref[...].astype(jnp.float32)
        if bits == 32:
            bq = b
        else:
            qmin = -(2.0 ** (bits - 1))
            qmax = 2.0 ** (bits - 1) - 1.0
            bq = jnp.clip(jnp.round(b * (1.0 / step)), qmin, qmax) * step
        o_ref[...] = (acc * out_scale + bq).astype(o_ref.dtype)

    if single_k:
        # K fits in one tile: write the result directly, skip the scratch round trip.
        epilogue(partial)
    else:
        k = pl.program_id(2)

        @pl.when(k == 0)
        def _():
            acc_ref[...] = jnp.zeros_like(acc_ref)

        acc_ref[...] += partial

        @pl.when(k == pl.num_programs(2) - 1)
        def _():
            epilogue(acc_ref[...])


def linear_q(x, weight, bias=None, *, bits=8, step=2.0 ** (-5),
             tm=256, tn=256, tk=512):
    """Forward of Linear_q.

    x:      (..., in_features) float
    weight: (out_features, in_features)
    bias:   (out_features,) or None
    """
    *lead, K = x.shape
    N, K2 = weight.shape
    assert K == K2, "in_features mismatch"
    M = math.prod(lead) if lead else 1

    x2 = x.reshape(M, K).astype(jnp.float32)          # reshape only -- no transpose
    w = weight.astype(jnp.float32)
    b = (jnp.zeros((N,), jnp.float32) if bias is None
         else bias.reshape(N).astype(jnp.float32))

    # Tile sizes: M tile sublane-aligned (x8), K/N tiles lane-dense (x128).
    tm_ = min(tm, _round_up(M, 8))
    tk_ = min(tk, _round_up(K, 128))
    tn_ = min(tn, _round_up(N, 128))
    Mp, Kp, Np = _round_up(M, tm_), _round_up(K, tk_), _round_up(N, tn_)

    # Zero-pad to tile multiples (no-op for already aligned shapes); zeros quantize to
    # zero and contribute nothing to the contraction.
    if (Mp, Kp) != (M, K):
        x2 = jnp.pad(x2, ((0, Mp - M), (0, Kp - K)))
    if (Np, Kp) != (N, K):
        w = jnp.pad(w, ((0, Np - N), (0, Kp - K)))
    if Np != N:
        b = jnp.pad(b, (0, Np - N))
    b2 = b.reshape(1, Np)

    grid = (Mp // tm_, Np // tn_, Kp // tk_)
    single_k = grid[2] == 1
    kernel = functools.partial(linear_q_kernel, bits=bits, step=step,
                               single_k=single_k)

    out_p = pl.pallas_call(
        kernel,
        out_shape=jax.ShapeDtypeStruct((Mp, Np), jnp.float32),
        grid_spec=pltpu.PrefetchScalarGridSpec(
            num_scalar_prefetch=0,
            grid=grid,
            in_specs=[
                pl.BlockSpec((tm_, tk_), lambda i, j, k: (i, k)),   # X tile
                pl.BlockSpec((tn_, tk_), lambda i, j, k: (j, k)),   # W tile (native layout)
                pl.BlockSpec((1, tn_), lambda i, j, k: (0, j)),     # bias tile
            ],
            out_specs=pl.BlockSpec((tm_, tn_), lambda i, j, k: (i, j)),
            scratch_shapes=[pltpu.VMEM((tm_, tn_), jnp.float32)],
        ),
        compiler_params=pltpu.CompilerParams(
            dimension_semantics=("parallel", "parallel", "arbitrary")),
    )(x2, w, b2)

    out = out_p
    if (Mp, Np) != (M, N):
        out = out[:M, :N]
    return out.reshape(*lead, N)


def _linear_q_ref(x, weight, bias, *, bits=8, step=2.0 ** (-5)):
    """Pure-JAX reference of the Linear_q forward."""
    if bits == 32:
        q = lambda v: v
    else:
        qmin = -(2.0 ** (bits - 1))
        qmax = 2.0 ** (bits - 1) - 1.0
        q = lambda v: jnp.clip(jnp.round(v / step), qmin, qmax) * step
    out = jnp.einsum("...k,nk->...n", q(x), q(weight))
    if bias is not None:
        out = out + q(bias)
    return out


if __name__ == "__main__":
    key = jax.random.PRNGKey(0)
    kx, kw = jax.random.split(key)

    # Small shapes consistent with the module: batch=2, seq=8, in=32, out=64.
    batch, seq, in_features, out_features = 2, 8, 32, 64
    x = jax.random.normal(kx, (batch, seq, in_features), dtype=jnp.float32)
    # Kaiming-uniform-like deterministic init for the weight; bias init is zeros
    # (matching Linear_q.reset_parameters()).
    bound = 1.0 / (in_features ** 0.5)
    weight = jax.random.uniform(kw, (out_features, in_features),
                                minval=-bound, maxval=bound, dtype=jnp.float32)
    bias = jnp.zeros((out_features,), dtype=jnp.float32)

    ok = True

    # bits = 8 (quantized path)
    out8 = linear_q(x, weight, bias, bits=8, step=2.0 ** (-5))
    jax.block_until_ready(out8)
    ref8 = _linear_q_ref(x, weight, bias, bits=8, step=2.0 ** (-5))
    ok &= out8.shape == (batch, seq, out_features)
    ok &= bool(jnp.allclose(out8, ref8, rtol=1e-5, atol=1e-4))

    # bits = 32 (identity-quantizer path)
    out32 = linear_q(x, weight, bias, bits=32)
    jax.block_until_ready(out32)
    ref32 = _linear_q_ref(x, weight, bias, bits=32)
    ok &= bool(jnp.allclose(out32, ref32, rtol=1e-5, atol=1e-4))

    assert ok, "mismatch vs reference"
    print("KERNEL_OK")
</pallas_src>

<mosaic_0001>
module attributes {stable_mosaic.version = 11 : i64} {
  func.func @linear_q_kernel(%arg0: i32, %arg1: i32, %arg2: i32, %arg3: memref<16x128xf32, #tpu.memory_space<vmem>>, %arg4: memref<128x128xf32, #tpu.memory_space<vmem>>, %arg5: memref<1x128xf32, #tpu.memory_space<vmem>>, %arg6: memref<16x128xf32, #tpu.memory_space<vmem>>, %arg7: memref<16x128xf32, #tpu.memory_space<vmem>>) attributes {dimension_semantics = [#tpu.dimension_semantics<parallel>, #tpu.dimension_semantics<parallel>, #tpu.dimension_semantics<arbitrary>], iteration_bounds = array<i64: 1, 1, 1>, scalar_prefetch = 0 : i64, scratch_operands = 1 : i64, tpu.core_type = #tpu.core_type<tc>, window_params = [{transform_indices = @transform_0, window_bounds = array<i64: 16, 128>}, {transform_indices = @transform_1, window_bounds = array<i64: 128, 128>}, {transform_indices = @transform_2, window_bounds = array<i64: 1, 128>}, {transform_indices = @transform_3, window_bounds = array<i64: 16, 128>}]} {
    %c0 = arith.constant 0 : index
    %c0_0 = arith.constant 0 : index
    %0 = vector.load %arg3[%c0, %c0_0] : memref<16x128xf32, #tpu.memory_space<vmem>>, vector<16x128xf32>
    %c0_1 = arith.constant 0 : index
    %c0_2 = arith.constant 0 : index
    %1 = vector.load %arg4[%c0_1, %c0_2] : memref<128x128xf32, #tpu.memory_space<vmem>>, vector<128x128xf32>
    %cst = arith.constant 3.200000e+01 : f32
    %2 = vector.broadcast %cst : f32 to vector<16x128xf32>
    %3 = arith.mulf %0, %2 : vector<16x128xf32>
    %4 = math.roundeven %3 : vector<16x128xf32>
    %cst_3 = arith.constant -1.280000e+02 : f32
    %cst_4 = arith.constant 1.270000e+02 : f32
    %5 = vector.broadcast %cst_3 : f32 to vector<16x128xf32>
    %6 = arith.maximumf %5, %4 : vector<16x128xf32>
    %7 = vector.broadcast %cst_4 : f32 to vector<16x128xf32>
    %8 = arith.minimumf %7, %6 : vector<16x128xf32>
    %9 = arith.truncf %8 : vector<16x128xf32> to vector<16x128xbf16>
    %cst_5 = arith.constant 3.200000e+01 : f32
    %10 = vector.broadcast %cst_5 : f32 to vector<128x128xf32>
    %11 = arith.mulf %1, %10 : vector<128x128xf32>
    %12 = math.roundeven %11 : vector<128x128xf32>
    %cst_6 = arith.constant -1.280000e+02 : f32
    %cst_7 = arith.constant 1.270000e+02 : f32
    %13 = vector.broadcast %cst_6 : f32 to vector<128x128xf32>
    %14 = arith.maximumf %13, %12 : vector<128x128xf32>
    %15 = vector.broadcast %cst_7 : f32 to vector<128x128xf32>
    %16 = arith.minimumf %15, %14 : vector<128x128xf32>
    %17 = arith.truncf %16 : vector<128x128xf32> to vector<128x128xbf16>
    %cst_8 = arith.constant dense<0.000000e+00> : vector<16x128xf32>
    %18 = tpu.matmul %9, %17, %cst_8 {dimension_numbers = #tpu.dot_dimension_numbers<[1], [1], [0], [0], [0, 0, 1, 0], [], []>} : vector<16x128xbf16>, vector<128x128xbf16>, vector<16x128xf32> -> vector<16x128xf32>
    %c0_9 = arith.constant 0 : index
    %c0_10 = arith.constant 0 : index
    %19 = vector.load %arg5[%c0_9, %c0_10] : memref<1x128xf32, #tpu.memory_space<vmem>>, vector<1x128xf32>
    %cst_11 = arith.constant 3.200000e+01 : f32
    %20 = vector.broadcast %cst_11 : f32 to vector<1x128xf32>
    %21 = arith.mulf %19, %20 : vector<1x128xf32>
    %22 = math.roundeven %21 : vector<1x128xf32>
    %cst_12 = arith.constant -1.280000e+02 : f32
    %cst_13 = arith.constant 1.270000e+02 : f32
    %23 = vector.broadcast %cst_12 : f32 to vector<1x128xf32>
    %24 = arith.maximumf %23, %22 : vector<1x128xf32>
    %25 = vector.broadcast %cst_13 : f32 to vector<1x128xf32>
    %26 = arith.minimumf %25, %24 : vector<1x128xf32>
    %cst_14 = arith.constant 3.125000e-02 : f32
    %27 = vector.broadcast %cst_14 : f32 to vector<1x128xf32>
    %28 = arith.mulf %26, %27 : vector<1x128xf32>
    %cst_15 = arith.constant 9.765625E-4 : f32
    %29 = vector.broadcast %cst_15 : f32 to vector<16x128xf32>
    %30 = arith.mulf %18, %29 : vector<16x128xf32>
    %31 = vector.broadcast %28 : vector<1x128xf32> to vector<16x128xf32>
    %32 = arith.addf %30, %31 : vector<16x128xf32>
    %c0_16 = arith.constant 0 : index
    %c0_17 = arith.constant 0 : index
    %33 = vector.load %arg6[%c0_16, %c0_17] : memref<16x128xf32, #tpu.memory_space<vmem>>, vector<16x128xf32>
    tpu.vector_store %arg6[%c0_16, %c0_17], %32 {strides = array<i32>} : memref<16x128xf32, #tpu.memory_space<vmem>>, vector<16x128xf32>,
    return
  }
  func.func @transform_0(%arg0: i32, %arg1: i32, %arg2: i32) -> (i32, i32) {
    %c0_i32 = arith.constant 0 : i32
    return %arg0, %arg2 : i32, i32
  }
  func.func @transform_1(%arg0: i32, %arg1: i32, %arg2: i32) -> (i32, i32) {
    %c0_i32 = arith.constant 0 : i32
    return %arg1, %arg2 : i32, i32
  }
  func.func @transform_2(%arg0: i32, %arg1: i32, %arg2: i32) -> (i32, i32) {
    %c0_i32 = arith.constant 0 : i32
    %c0_i32_0 = arith.constant 0 : i32
    return %c0_i32, %arg1 : i32, i32
  }
  func.func @transform_3(%arg0: i32, %arg1: i32, %arg2: i32) -> (i32, i32) {
    %c0_i32 = arith.constant 0 : i32
    return %arg0, %arg1 : i32, i32
  }
}

</mosaic_0001>

<llo_original>
// kernel: tpu_custom_call.1
$region0: #{tpu_custom_call.1}
  #allocation0 [shape = 'u32[]', space=smem, size = 0x4, offset = 0x4, fixed_abs, tag = 'smem constant byte address 0x4 - core index']
  #allocation1 [shape = 'u32[144,128]{1,0:T(1,128)}', space=vmem, size = 0x12000, scoped, tag = 'internal scratch']
  #allocation2 [shape = 'f32[16,128]{1,0:T(8,128)}', space=vmem, size = 0x2000, scoped, tag = 'scratch operand']
  %s0 = inlined_call_operand.hbm [shape: f32[16,128], index: 0, kind: input, shape index: {}]
  %s1 = inlined_call_operand.hbm [shape: f32[128,128], index: 1, kind: input, shape index: {}]
  %s2 = inlined_call_operand.vmem [shape: f32[1,128], index: 2, kind: input, shape index: {}]
  %s3 = inlined_call_operand.hbm [shape: f32[16,128], index: 3, kind: output, shape index: {}]
  %s4 = sld [smem:[#allocation0]]
  $region30: #{tpu_custom_call.1} parent=0
    _
  %s6 = ssub.s32 1, %s4
  %s7 = scalar_select 0, %s6, %s4
  $region1: #{tpu_custom_call.1} parent=0
    #allocation3 [shape = 'u8[8192]{0}', space=vmem, size = 0x2000, scoped, tag = 'input window, operand 0, single buffered']
    #allocation4 [shape = 's32[1]{0}', space=sflag, size = 0x4, scoped, tag = 'scoped memory for tpu_custom_call.1']
    #allocation5 [shape = 's32[1]{0}', space=sflag, size = 0x4, scoped, tag = 'scoped memory for tpu_custom_call.1']
    #allocation6 [shape = 'u8[65536]{0}', space=vmem, size = 0x10000, scoped, tag = 'input window, operand 1, single buffered']
    #allocation7 [shape = 's32[1]{0}', space=sflag, size = 0x4, scoped, tag = 'scoped memory for tpu_custom_call.1']
    #allocation8 [shape = 'u8[8192]{0}', space=vmem, size = 0x2000, scoped, tag = 'output window, operand 0, single buffered']
    %8 = vsyncpa [#allocation4], 0
    %9 = vsyncpa [#allocation7], 0
    %10 = vsyncpa [#allocation5], 0
    // Predicated region
    $region2: #{tpu_custom_call.1} parent=1 // pred_check
      _
    $region3: #{tpu_custom_call.1} parent=1 // pred_check_branch
      %12 = sbr.rel (0) target = $region5
    $region4: #{tpu_custom_call.1} parent=1 // pred_region
      %s14 = ssub.s32 256, 256
      %15 = vsyncadd [#allocation4], %s14
      %s16 = sshll.u32 [#allocation3], 4
      %s17 = int_to_ptr.vmem [resolvable:$true] %s16
      %22 = dma.hbm_to_vmem [thread:$0]  %s0, 256, %s17, [#allocation4], 128, 128, 8
    $region5: #{tpu_custom_call.1} parent=1 // pred_fallthru
      _
    // Predicated region
    $region6: #{tpu_custom_call.1} parent=1 // pred_check
      _
    $region7: #{tpu_custom_call.1} parent=1 // pred_check_branch
      %24 = sbr.rel (0) target = $region9
    $region8: #{tpu_custom_call.1} parent=1 // pred_region
      %s26 = ssub.s32 2048, 2048
      %27 = vsyncadd [#allocation7], %s26
      %s28 = sshll.u32 [#allocation6], 4
      %s29 = int_to_ptr.vmem [resolvable:$true] %s28
      %34 = dma.hbm_to_vmem [thread:$0]  %s1, 2048, %s29, [#allocation7], 128, 128, 8
    $region9: #{tpu_custom_call.1} parent=1 // pred_fallthru
      _
    // Predicated region
    $region10: #{tpu_custom_call.1} parent=1 // pred_check
      _
    $region11: #{tpu_custom_call.1} parent=1 // pred_check_branch
      %36 = sbr.rel (0) target = $region13
    $region12: #{tpu_custom_call.1} parent=1 // pred_region
      _
    $region13: #{tpu_custom_call.1} parent=1 // pred_fallthru
      _
    // Predicated region
    $region14: #{tpu_custom_call.1} parent=1 // pred_check
      _
    $region15: #{tpu_custom_call.1} parent=1 // pred_check_branch
      %38 = sbr.rel (0) target = $region17
    $region16: #{tpu_custom_call.1} parent=1 // pred_region
      %39 = dma.done [#allocation4], 256
    $region17: #{tpu_custom_call.1} parent=1 // pred_fallthru
      _
    // Predicated region
    $region18: #{tpu_custom_call.1} parent=1 // pred_check
      _
    $region19: #{tpu_custom_call.1} parent=1 // pred_check_branch
      %41 = sbr.rel (0) target = $region21
    $region20: #{tpu_custom_call.1} parent=1 // pred_region
      %42 = dma.done [#allocation7], 2048
    $region21: #{tpu_custom_call.1} parent=1 // pred_fallthru
      _
    %v44 = vld [vmem:[#allocation3] sm:$0xff]
    %v45 = vld [vmem:[#allocation3 + $0x8] sm:$0xff]
    %v46 = vld [vmem:[#allocation6] sm:$0xff]
    %v47 = vld [vmem:[#allocation6 + $0x8] sm:$0xff]
    %v48 = vld [vmem:[#allocation6 + $0x10] sm:$0xff]
    %v49 = vld [vmem:[#allocation6 + $0x18] sm:$0xff]
    %v50 = vld [vmem:[#allocation6 + $0x20] sm:$0xff]
    %v51 = vld [vmem:[#allocation6 + $0x28] sm:$0xff]
    %v52 = vld [vmem:[#allocation6 + $0x30] sm:$0xff]
    %v53 = vld [vmem:[#allocation6 + $0x38] sm:$0xff]
    %v54 = vld [vmem:[#allocation6 + $0x40] sm:$0xff]
    %v55 = vld [vmem:[#allocation6 + $0x48] sm:$0xff]
    %v56 = vld [vmem:[#allocation6 + $0x50] sm:$0xff]
    %v57 = vld [vmem:[#allocation6 + $0x58] sm:$0xff]
    %v58 = vld [vmem:[#allocation6 + $0x60] sm:$0xff]
    %v59 = vld [vmem:[#allocation6 + $0x68] sm:$0xff]
    %v60 = vld [vmem:[#allocation6 + $0x70] sm:$0xff]
    %v61 = vld [vmem:[#allocation6 + $0x78] sm:$0xff]
    %v62 = vmul.f32 %v44, 32.0
    %v63 = vmul.f32 %v45, 32.0
    %v64 = vround.ne.pseudo %v62
    %v65 = vround.ne.pseudo %v63
    %v66 = vmax.f32 %v64, -128.0
    %v67 = vmax.f32 %v65, -128.0
    %v68 = vmin.f32 %v66, 127.0
    %v69 = vmin.f32 %v67, 127.0
    %v70 = vpack.c.bf16 %v69, %v68
    %v71 = vmul.f32 %v46, 32.0
    %v72 = vmul.f32 %v47, 32.0
    %v73 = vmul.f32 %v48, 32.0
    %v74 = vmul.f32 %v49, 32.0
    %v75 = vmul.f32 %v50, 32.0
    %v76 = vmul.f32 %v51, 32.0
    %v77 = vmul.f32 %v52, 32.0
    %v78 = vmul.f32 %v53, 32.0
    %v79 = vmul.f32 %v54, 32.0
    %v80 = vmul.f32 %v55, 32.0
    %v81 = vmul.f32 %v56, 32.0
    %v82 = vmul.f32 %v57, 32.0
    %v83 = vmul.f32 %v58, 32.0
    %v84 = vmul.f32 %v59, 32.0
    %v85 = vmul.f32 %v60, 32.0
    %v86 = vmul.f32 %v61, 32.0
    %v87 = vround.ne.pseudo %v71
    %v88 = vround.ne.pseudo %v72
    %v89 = vround.ne.pseudo %v73
    %v90 = vround.ne.pseudo %v74
    %v91 = vround.ne.pseudo %v75
    %v92 = vround.ne.pseudo %v76
    %v93 = vround.ne.pseudo %v77
    %v94 = vround.ne.pseudo %v78
    %v95 = vround.ne.pseudo %v79
    %v96 = vround.ne.pseudo %v80
    %v97 = vround.ne.pseudo %v81
    %v98 = vround.ne.pseudo %v82
    %v99 = vround.ne.pseudo %v83
    %v100 = vround.ne.pseudo %v84
    %v101 = vround.ne.pseudo %v85
    %v102 = vround.ne.pseudo %v86
    %v103 = vmax.f32 %v87, -128.0
    %v104 = vmax.f32 %v88, -128.0
    %v105 = vmax.f32 %v89, -128.0
    %v106 = vmax.f32 %v90, -128.0
    %v107 = vmax.f32 %v91, -128.0
    %v108 = vmax.f32 %v92, -128.0
    %v109 = vmax.f32 %v93, -128.0
    %v110 = vmax.f32 %v94, -128.0
    %v111 = vmax.f32 %v95, -128.0
    %v112 = vmax.f32 %v96, -128.0
    %v113 = vmax.f32 %v97, -128.0
    %v114 = vmax.f32 %v98, -128.0
    %v115 = vmax.f32 %v99, -128.0
    %v116 = vmax.f32 %v100, -128.0
    %v117 = vmax.f32 %v101, -128.0
    %v118 = vmax.f32 %v102, -128.0
    %v119 = vmin.f32 %v103, 127.0
    %v120 = vmin.f32 %v104, 127.0
    %v121 = vmin.f32 %v105, 127.0
    %v122 = vmin.f32 %v106, 127.0
    %v123 = vmin.f32 %v107, 127.0
    %v124 = vmin.f32 %v108, 127.0
    %v125 = vmin.f32 %v109, 127.0
    %v126 = vmin.f32 %v110, 127.0
    %v127 = vmin.f32 %v111, 127.0
    %v128 = vmin.f32 %v112, 127.0
    %v129 = vmin.f32 %v113, 127.0
    %v130 = vmin.f32 %v114, 127.0
    %v131 = vmin.f32 %v115, 127.0
    %v132 = vmin.f32 %v116, 127.0
    %v133 = vmin.f32 %v117, 127.0
    %v134 = vmin.f32 %v118, 127.0
    %v135 = vpack.c.bf16 %v120, %v119
    %v136 = vpack.c.bf16 %v122, %v121
    %v137 = vpack.c.bf16 %v124, %v123
    %v138 = vpack.c.bf16 %v126, %v125
    %v139 = vpack.c.bf16 %v128, %v127
    %v140 = vpack.c.bf16 %v130, %v129
    %v141 = vpack.c.bf16 %v132, %v131
    %v142 = vpack.c.bf16 %v134, %v133
    %143 = vmatprep.subr.bf16.mxu0 0
    %144 = vmatpush1.bf16.xpose.msra.mxu0 %v142
    %145 = vmatprep.subr.bf16.mxu0 0
    %146 = vmatpush1.bf16.xpose.msra.mxu0 %v141
    %147 = vmatprep.subr.bf16.mxu0 0
    %148 = vmatpush1.bf16.xpose.msra.mxu0 %v140
    %149 = vmatprep.subr.bf16.mxu0 0
    %150 = vmatpush1.bf16.xpose.msra.mxu0 %v139
    %151 = vmatprep.subr.bf16.mxu0 0
    %152 = vmatpush1.bf16.xpose.msra.mxu0 %v138
    %153 = vmatprep.subr.bf16.mxu0 0
    %154 = vmatpush1.bf16.xpose.msra.mxu0 %v137
    %155 = vmatprep.subr.bf16.mxu0 0
    %156 = vmatpush1.bf16.xpose.msra.mxu0 %v136
    %157 = vmatprep.subr.bf16.mxu0 0
    %158 = vmatpush1.bf16.xpose.msra.mxu0 %v135
    %159 = vmatprep.subr.bf16.mxu0 0
    %160 = vmatpush2.bf16.xpose.msra.mxu0 0
    %161 = vmatprep.subr.bf16.mxu0 0
    %162 = vmatpush2.bf16.xpose.msra.mxu0 0
    %163 = vmatprep.subr.bf16.mxu0 0
    %164 = vmatpush2.bf16.xpose.msra.mxu0 0
    %165 = vmatprep.subr.bf16.mxu0 0
    %166 = vmatpush2.bf16.xpose.msra.mxu0 0
    %167 = vmatprep.subr.bf16.mxu0 0
    %168 = vmatpush2.bf16.xpose.msra.mxu0 0
    %169 = vmatprep.subr.bf16.mxu0 0
    %170 = vmatpush2.bf16.xpose.msra.mxu0 0
    %171 = vmatprep.subr.bf16.mxu0 0
    %172 = vmatpush2.bf16.xpose.msra.mxu0 0
    %173 = vmatprep.subr.bf16.mxu0 0
    %174 = vmatpush2.bf16.xpose.msra.mxu0 0
    %175 = vmatprep.mubr.bf16.mxu0 0
    %176 = vmatmul.mubr.bf16.gmra.mxu0 %v70
    %v177 = vpop.f32.mrf.mxu0
    %v178 = vadd.f32 0.0, %v177
    %v179 = vpop.f32.mrf.mxu0
    %v180 = vpop.f32.mrf.mxu0
    %v181 = vadd.f32 0.0, %v180
    %v182 = vpop.f32.mrf.mxu0
    %183 = vdwg.mxu0
    %v184 = vld [vmem:[%s2] sm:$0x1]
    %v185 = vmul.f32 %v184, 32.0
    %v186 = vround.ne.pseudo %v185
    %v187 = vmax.f32 %v186, -128.0
    %v188 = vmin.f32 %v187, 127.0
    %v189 = vmul.f32 %v188, 0.03125
    %v190 = vmul.f32 %v178, 0.0009765625
    %v191 = vmul.f32 %v181, 0.0009765625
    %v193 = vlaneseq
    %v194 = vshrl.u32 %v193, 7
    %v195 = vsub.s32 0, %v194
    %v196 = vrot.slane %v189, %v195
    %v198 = vadd.f32 %v190, %v196
    %v199 = vadd.f32 %v191, %v196
    %200 = vst [vmem:[#allocation8] sm:$0xff] %v198
    %201 = vst [vmem:[#allocation8 + $0x8] sm:$0xff] %v199
    // Predicated region
    $region22: #{tpu_custom_call.1} parent=1 // pred_check
      _
    $region23: #{tpu_custom_call.1} parent=1 // pred_check_branch
      %203 = sbr.rel (0) target = $region25
    $region24: #{tpu_custom_call.1} parent=1 // pred_region
      %s205 = ssub.s32 256, 256
      %206 = vsyncadd [#allocation5], %s205
      %s207 = sshll.u32 [#allocation8], 4
      %s208 = int_to_ptr.vmem [resolvable:$true] %s207
      %213 = dma.vmem_to_hbm [thread:$0]  %s208, 256, %s3, [#allocation5], 128, 128, 8
    $region25: #{tpu_custom_call.1} parent=1 // pred_fallthru
      _
    // Predicated region
    $region26: #{tpu_custom_call.1} parent=1 // pred_check
      _
    $region27: #{tpu_custom_call.1} parent=1 // pred_check_branch
      %215 = sbr.rel (0) target = $region29
    $region28: #{tpu_custom_call.1} parent=1 // pred_region
      %216 = dma.done [#allocation5], 256
    $region29: #{tpu_custom_call.1} parent=1 // pred_fallthru
      _
    %217 = vsyncpa [#allocation4], 1
    %218 = vsyncpa [#allocation7], 1
    %219 = vsyncpa [#allocation5], 1

</llo_original>
